<compile_context>
chip_gen: v5e
topology: v5e:2x2
jax: 0.10.0
libtpu: 0.0.40
codegen_flags: <defaults>
</compile_context>

<pallas_src>
import functools

import jax
import jax.numpy as jnp
from jax.experimental import pallas as pl
from jax.experimental.pallas import tpu as pltpu

_LANES = 128      # vreg lane width
_SUBLANES = 8     # f32 vreg sublane count
_TARGET_STEP_BYTES = 6 * 1024 * 1024   # HBM bytes moved per grid step (all streams)
_VMEM_LIMIT_BYTES = 40 * 1024 * 1024   # comfortable on v5e/v6e (128 MiB) and v7x (64 MiB)


def _sum_sq_diff_kernel(*refs, num_pairs, valid_rows, tile_rows):
    """Accumulate sum((t - p)^2) over `num_pairs` streams into an (8,128) partial."""
    out_ref = refs[-1]
    j = pl.program_id(0)

    @pl.when(j == 0)
    def _init():
        out_ref[...] = jnp.zeros_like(out_ref)

    # In-kernel f32 cast + squared difference: pure VPU work, inputs travel
    # over HBM in their native (possibly sub-32-bit) dtype.
    part = None
    for k in range(num_pairs):
        t = refs[2 * k][...].astype(jnp.float32)
        p = refs[2 * k + 1][...].astype(jnp.float32)
        d = t - p
        part = d * d if part is None else part + d * d

    # Mask rows past the true row count (only emitted when the last tile is
    # ragged).  Out-of-bounds rows of the block contain undefined data; the
    # select with a False predicate zeroes them regardless of their value.
    if valid_rows % tile_rows != 0:
        row = (j * tile_rows
               + jax.lax.broadcasted_iota(jnp.int32, (tile_rows, _LANES), 0))
        part = jnp.where(row < valid_rows, part, 0.0)

    # Tree-fold the (tile_rows, 128) partial down to one (8, 128) vreg with
    # pure VPU adds (no cross-lane/sublane work on the hot path) and
    # accumulate into the grid-resident output block.
    folded = jnp.sum(
        part.reshape(tile_rows // _SUBLANES, _SUBLANES, _LANES), axis=0)
    out_ref[...] += folded


def _rows_multiple(itemsize):
    # Packed-sublane quantum: f32 -> 8, bf16/f16 -> 16, int8/fp8 -> 32.
    return {4: 8, 2: 16, 1: 32}.get(itemsize, 8)


def _sum_sq_diff_partial(pairs):
    """(8,128) f32 partial of sum_k sum((target_k - predict_k)^2).

    All arrays in `pairs` must have the same element count (dtypes may differ).
    """
    flats = []
    n = None
    for t, p in pairs:
        t = t.reshape(-1)
        p = p.reshape(-1)
        if n is None:
            n = t.size
        assert t.size == n and p.size == n, "all fused streams must have equal size"
        flats += [t, p]

    # Lane alignment: pad only the sub-128 ragged tail (zero pad contributes
    # exactly 0).  For 128-aligned n this path is completely copy-free.
    rows = -(-n // _LANES)
    padded_n = rows * _LANES
    if padded_n != n:
        flats = [jnp.pad(x, (0, padded_n - n)) for x in flats]
    mats = [x.reshape(rows, _LANES) for x in flats]

    # Dtype-aware tile sizing: ~_TARGET_STEP_BYTES of HBM traffic per grid step
    # across all streams; tile rows a multiple of the packed-sublane quantum.
    rows_mult = max(_rows_multiple(x.dtype.itemsize) for x in mats)
    bytes_per_row = _LANES * sum(x.dtype.itemsize for x in mats)
    tile_rows = max(rows_mult,
                    (_TARGET_STEP_BYTES // bytes_per_row) // rows_mult * rows_mult)
    rows_rounded = -(-rows // rows_mult) * rows_mult
    tile_rows = min(tile_rows, rows_rounded)      # don't over-allocate for small n
    num_tiles = -(-rows // tile_rows)

    kernel = functools.partial(
        _sum_sq_diff_kernel,
        num_pairs=len(pairs), valid_rows=rows, tile_rows=tile_rows)

    in_spec = pl.BlockSpec((tile_rows, _LANES), lambda i: (i, 0))
    return pl.pallas_call(
        kernel,
        out_shape=jax.ShapeDtypeStruct((_SUBLANES, _LANES), jnp.float32),
        grid=(num_tiles,),
        in_specs=[in_spec] * len(mats),
        out_specs=pl.BlockSpec((_SUBLANES, _LANES), lambda i: (0, 0)),
        compiler_params=pltpu.CompilerParams(
            dimension_semantics=("arbitrary",),
            vmem_limit_bytes=_VMEM_LIMIT_BYTES,
        ),
    )(*mats)


def loss_function(near_target, far_target, near_predict, far_predict):
    """Pallas equivalent of LossFunction.forward.  Returns an f32 scalar."""
    if near_target.size == far_target.size:
        # Fused fast path: a single pass over HBM for all four streams.
        partial = _sum_sq_diff_partial(
            [(near_target, near_predict), (far_target, far_predict)])
    else:
        # near/far element counts differ: reduce each pair on its own.
        partial = (_sum_sq_diff_partial([(near_target, near_predict)])
                   + _sum_sq_diff_partial([(far_target, far_predict)]))
    # Final tiny (8,128) -> scalar reduction in XLA (4 KiB of data).
    return jnp.sum(partial)


if __name__ == "__main__":
    key = jax.random.PRNGKey(0)
    k1, k2, k3, k4 = jax.random.split(key, 4)
    batch = 32  # matches WeightMSELoss.batch_size

    near_target = jax.random.normal(k1, (batch,), dtype=jnp.float32)
    far_target = jax.random.normal(k2, (batch,), dtype=jnp.float32)
    near_predict = jax.random.normal(k3, (batch,), dtype=jnp.float32)
    far_predict = jax.random.normal(k4, (batch,), dtype=jnp.float32)

    loss = loss_function(near_target, far_target, near_predict, far_predict)
    loss = jax.block_until_ready(loss)

    # Reference check (plain JAX).
    ref = jnp.sum((near_target - near_predict) ** 2) + jnp.sum(
        (far_target - far_predict) ** 2)
    assert jnp.allclose(loss, ref, rtol=1e-5, atol=1e-5), (loss, ref)

    print("KERNEL_OK")
</pallas_src>

<mosaic_0001>
module attributes {stable_mosaic.version = 11 : i64} {
  func.func @_sum_sq_diff_kernel(%arg0: i32, %arg1: memref<8x128xf32, #tpu.memory_space<vmem>>, %arg2: memref<8x128xf32, #tpu.memory_space<vmem>>, %arg3: memref<8x128xf32, #tpu.memory_space<vmem>>, %arg4: memref<8x128xf32, #tpu.memory_space<vmem>>, %arg5: memref<8x128xf32, #tpu.memory_space<vmem>>) attributes {dimension_semantics = [#tpu.dimension_semantics<arbitrary>], iteration_bounds = array<i64: 1>, scalar_prefetch = 0 : i64, scratch_operands = 0 : i64, tpu.core_type = #tpu.core_type<tc>, window_params = [{transform_indices = @transform_0, window_bounds = array<i64: 8, 128>}, {transform_indices = @transform_1, window_bounds = array<i64: 8, 128>}, {transform_indices = @transform_2, window_bounds = array<i64: 8, 128>}, {transform_indices = @transform_3, window_bounds = array<i64: 8, 128>}, {pipeline_mode = #tpu.pipeline_mode<synchronous>, transform_indices = @transform_4, window_bounds = array<i64: 8, 128>}]} {
    %c0_i32 = arith.constant 0 : i32
    %0 = arith.cmpi eq, %arg0, %c0_i32 : i32
    %1 = arith.extui %0 : i1 to i32
    %c0_i32_0 = arith.constant 0 : i32
    %2 = arith.cmpi ne, %1, %c0_i32_0 : i32
    scf.if %2 {
      %cst_13 = arith.constant 0.000000e+00 : f32
      %25 = vector.broadcast %cst_13 : f32 to vector<8x128xf32>
      %c0_14 = arith.constant 0 : index
      %c0_15 = arith.constant 0 : index
      %26 = vector.load %arg5[%c0_14, %c0_15] : memref<8x128xf32, #tpu.memory_space<vmem>>, vector<8x128xf32>
      tpu.vector_store %arg5[%c0_14, %c0_15], %25 {strides = array<i32>} : memref<8x128xf32, #tpu.memory_space<vmem>>, vector<8x128xf32>,
    } else {
    }
    %c0 = arith.constant 0 : index
    %c0_1 = arith.constant 0 : index
    %3 = vector.load %arg1[%c0, %c0_1] : memref<8x128xf32, #tpu.memory_space<vmem>>, vector<8x128xf32>
    %c0_2 = arith.constant 0 : index
    %c0_3 = arith.constant 0 : index
    %4 = vector.load %arg2[%c0_2, %c0_3] : memref<8x128xf32, #tpu.memory_space<vmem>>, vector<8x128xf32>
    %5 = arith.subf %3, %4 : vector<8x128xf32>
    %6 = arith.mulf %5, %5 : vector<8x128xf32>
    %c0_4 = arith.constant 0 : index
    %c0_5 = arith.constant 0 : index
    %7 = vector.load %arg3[%c0_4, %c0_5] : memref<8x128xf32, #tpu.memory_space<vmem>>, vector<8x128xf32>
    %c0_6 = arith.constant 0 : index
    %c0_7 = arith.constant 0 : index
    %8 = vector.load %arg4[%c0_6, %c0_7] : memref<8x128xf32, #tpu.memory_space<vmem>>, vector<8x128xf32>
    %9 = arith.subf %7, %8 : vector<8x128xf32>
    %10 = arith.mulf %9, %9 : vector<8x128xf32>
    %11 = arith.addf %6, %10 : vector<8x128xf32>
    %c8_i32 = arith.constant 8 : i32
    %12 = arith.muli %arg0, %c8_i32 : i32
    %13 = tpu.iota {dimensions = array<i32: 0>} : vector<8x128xi32>
    %14 = vector.broadcast %12 : i32 to vector<8x128xi32>
    %15 = arith.addi %14, %13 : vector<8x128xi32>
    %c1_i32 = arith.constant 1 : i32
    %16 = vector.broadcast %c1_i32 : i32 to vector<8x128xi32>
    %17 = arith.cmpi slt, %15, %16 : vector<8x128xi32>
    %cst = arith.constant 0.000000e+00 : f32
    %18 = vector.broadcast %cst : f32 to vector<8x128xf32>
    %19 = arith.select %17, %11, %18 : vector<8x128xi1>, vector<8x128xf32>
    %20 = vector.shape_cast %19 : vector<8x128xf32> to vector<1x8x128xf32>
    %cst_8 = arith.constant dense<0.000000e+00> : vector<8x128xf32>
    %21 = vector.multi_reduction <add>, %20, %cst_8 [0] : vector<1x8x128xf32> to vector<8x128xf32>
    %c0_9 = arith.constant 0 : index
    %c0_10 = arith.constant 0 : index
    %22 = vector.load %arg5[%c0_9, %c0_10] : memref<8x128xf32, #tpu.memory_space<vmem>>, vector<8x128xf32>
    %23 = arith.addf %22, %21 : vector<8x128xf32>
    %c0_11 = arith.constant 0 : index
    %c0_12 = arith.constant 0 : index
    %24 = vector.load %arg5[%c0_11, %c0_12] : memref<8x128xf32, #tpu.memory_space<vmem>>, vector<8x128xf32>
    tpu.vector_store %arg5[%c0_11, %c0_12], %23 {strides = array<i32>} : memref<8x128xf32, #tpu.memory_space<vmem>>, vector<8x128xf32>,
    return
  }
  func.func @transform_0(%arg0: i32) -> (i32, i32) {
    %c0_i32 = arith.constant 0 : i32
    %c0_i32_0 = arith.constant 0 : i32
    return %arg0, %c0_i32 : i32, i32
  }
  func.func @transform_1(%arg0: i32) -> (i32, i32) {
    %c0_i32 = arith.constant 0 : i32
    %c0_i32_0 = arith.constant 0 : i32
    return %arg0, %c0_i32 : i32, i32
  }
  func.func @transform_2(%arg0: i32) -> (i32, i32) {
    %c0_i32 = arith.constant 0 : i32
    %c0_i32_0 = arith.constant 0 : i32
    return %arg0, %c0_i32 : i32, i32
  }
  func.func @transform_3(%arg0: i32) -> (i32, i32) {
    %c0_i32 = arith.constant 0 : i32
    %c0_i32_0 = arith.constant 0 : i32
    return %arg0, %c0_i32 : i32, i32
  }
  func.func @transform_4(%arg0: i32) -> (i32, i32) {
    %c0_i32 = arith.constant 0 : i32
    %c0_i32_0 = arith.constant 0 : i32
    %c0_i32_1 = arith.constant 0 : i32
    return %c0_i32, %c0_i32_0 : i32, i32
  }
}

</mosaic_0001>

<llo_original>
// kernel: tpu_custom_call.1
$region0: #{tpu_custom_call.1}
  #allocation0 [shape = 'u32[]', space=smem, size = 0x4, offset = 0x4, fixed_abs, tag = 'smem constant byte address 0x4 - core index']
  #allocation1 [shape = 'u32[72,128]{1,0:T(1,128)}', space=vmem, size = 0x9000, scoped, tag = 'internal scratch']
  %s0 = inlined_call_operand.hbm [shape: f32[1,128], index: 0, kind: input, shape index: {}]
  %s1 = inlined_call_operand.hbm [shape: f32[1,128], index: 1, kind: input, shape index: {}]
  %s2 = inlined_call_operand.vmem [shape: f32[1,128], index: 2, kind: input, shape index: {}]
  %s3 = inlined_call_operand.vmem [shape: f32[1,128], index: 3, kind: input, shape index: {}]
  %s4 = inlined_call_operand.hbm [shape: f32[8,128], index: 4, kind: output, shape index: {}]
  %s5 = sld [smem:[#allocation0]]
  $region38: #{tpu_custom_call.1} parent=0
    _
  %s7 = ssub.s32 1, %s5
  %s8 = scalar_select 0, %s7, %s5
  $region1: #{tpu_custom_call.1} parent=0
    #allocation2 [shape = 'u8[4096]{0}', space=vmem, size = 0x1000, scoped, tag = 'input window, operand 0, single buffered']
    #allocation3 [shape = 's32[1]{0}', space=sflag, size = 0x4, scoped, tag = 'scoped memory for tpu_custom_call.1']
    #allocation4 [shape = 's32[1]{0}', space=sflag, size = 0x4, scoped, tag = 'scoped memory for tpu_custom_call.1']
    #allocation5 [shape = 'u8[4096]{0}', space=vmem, size = 0x1000, scoped, tag = 'input window, operand 1, single buffered']
    #allocation6 [shape = 's32[1]{0}', space=sflag, size = 0x4, scoped, tag = 'scoped memory for tpu_custom_call.1']
    #allocation7 [shape = 'u8[4096]{0}', space=vmem, size = 0x1000, scoped, tag = 'output window, operand 0, single buffered']
    %9 = vsyncpa [#allocation3], 0
    %10 = vsyncpa [#allocation6], 0
    %11 = vsyncpa [#allocation4], 0
    // Predicated region
    $region2: #{tpu_custom_call.1} parent=1 // pred_check
      _
    $region3: #{tpu_custom_call.1} parent=1 // pred_check_branch
      %13 = sbr.rel (0) target = $region5
    $region4: #{tpu_custom_call.1} parent=1 // pred_region
      %15 = vsyncadd [#allocation3], 112
      %s16 = sshll.u32 %s0, 4
      %s17 = int_to_ptr.hbm [resolvable:$true] %s16
      %s18 = sshll.u32 [#allocation2], 4
      %s19 = int_to_ptr.vmem [resolvable:$true] %s18
      %24 = dma.hbm_to_vmem [thread:$0]  %s17, 16, %s19, [#allocation3], 16, 16, 1
    $region5: #{tpu_custom_call.1} parent=1 // pred_fallthru
      _
    // Predicated region
    $region6: #{tpu_custom_call.1} parent=1 // pred_check
      _
    $region7: #{tpu_custom_call.1} parent=1 // pred_check_branch
      %26 = sbr.rel (0) target = $region9
    $region8: #{tpu_custom_call.1} parent=1 // pred_region
      %28 = vsyncadd [#allocation6], 112
      %s29 = sshll.u32 %s1, 4
      %s30 = int_to_ptr.hbm [resolvable:$true] %s29
      %s31 = sshll.u32 [#allocation5], 4
      %s32 = int_to_ptr.vmem [resolvable:$true] %s31
      %37 = dma.hbm_to_vmem [thread:$0]  %s30, 16, %s32, [#allocation6], 16, 16, 1
    $region9: #{tpu_custom_call.1} parent=1 // pred_fallthru
      _
    // Predicated region
    $region10: #{tpu_custom_call.1} parent=1 // pred_check
      _
    $region11: #{tpu_custom_call.1} parent=1 // pred_check_branch
      %39 = sbr.rel (0) target = $region13
    $region12: #{tpu_custom_call.1} parent=1 // pred_region
      _
    $region13: #{tpu_custom_call.1} parent=1 // pred_fallthru
      _
    // Predicated region
    $region14: #{tpu_custom_call.1} parent=1 // pred_check
      _
    $region15: #{tpu_custom_call.1} parent=1 // pred_check_branch
      %41 = sbr.rel (0) target = $region17
    $region16: #{tpu_custom_call.1} parent=1 // pred_region
      _
    $region17: #{tpu_custom_call.1} parent=1 // pred_fallthru
      _
    // Predicated region
    $region18: #{tpu_custom_call.1} parent=1 // pred_check
      _
    $region19: #{tpu_custom_call.1} parent=1 // pred_check_branch
      %43 = sbr.rel (0) target = $region21
    $region20: #{tpu_custom_call.1} parent=1 // pred_region
      %45 = dma.done [#allocation3], 128
    $region21: #{tpu_custom_call.1} parent=1 // pred_fallthru
      _
    // Predicated region
    $region22: #{tpu_custom_call.1} parent=1 // pred_check
      _
    $region23: #{tpu_custom_call.1} parent=1 // pred_check_branch
      %47 = sbr.rel (0) target = $region25
    $region24: #{tpu_custom_call.1} parent=1 // pred_region
      %49 = dma.done [#allocation6], 128
    $region25: #{tpu_custom_call.1} parent=1 // pred_fallthru
      _
    %p50 = scmp.eq.s32.totalorder 0, 0
    // Predicated region
    $region26: #{tpu_custom_call.1} parent=1 // pred_check
      %p51 = pneg %p50
    $region27: #{tpu_custom_call.1} parent=1 // pred_check_branch
      %53 = sbr.rel (%p51) target = $region29
    $region28: #{tpu_custom_call.1} parent=1 // pred_region
      %54 = vst [vmem:[#allocation7] sm:$0xff] 0.0
    $region29: #{tpu_custom_call.1} parent=1 // pred_fallthru
      _
    %v55 = vld [vmem:[#allocation2] sm:$0xff]
    %v56 = vld [vmem:[#allocation5] sm:$0xff]
    %v57 = vsub.f32 %v55, %v56
    %v58 = vmul.f32 %v57, %v57
    %v59 = vld [vmem:[%s2] sm:$0xff]
    %v60 = vld [vmem:[%s3] sm:$0xff]
    %v61 = vsub.f32 %v59, %v60
    %v62 = vmul.f32 %v61, %v61
    %v63 = vadd.f32 %v58, %v62
    %s64 = smul.u32 0, 8
    %v65 = vlaneseq
    %v66 = vshrl.u32 %v65, 7
    %v67 = vstv %s64
    %v68 = vadd.s32 %v67, %v66
    %vm69 = vcmp.lt.s32.totalorder %v68, 1
    %v70 = vsel %vm69, %v63, 0.0
    %v71 = vadd.f32 %v70, 0.0
    %v72 = vld [vmem:[#allocation7] sm:$0xff]
    %v73 = vadd.f32 %v72, %v71
    %74 = vst [vmem:[#allocation7] sm:$0xff] %v73
    // Predicated region
    $region30: #{tpu_custom_call.1} parent=1 // pred_check
      _
    $region31: #{tpu_custom_call.1} parent=1 // pred_check_branch
      %76 = sbr.rel (0) target = $region33
    $region32: #{tpu_custom_call.1} parent=1 // pred_region
      %78 = vsyncadd [#allocation4], 0
      %s80 = sshll.u32 [#allocation7], 4
      %s81 = int_to_ptr.vmem [resolvable:$true] %s80
      %s82 = sshll.u32 %s4, 4
      %s83 = int_to_ptr.hbm [resolvable:$true] %s82
      %85 = dma.vmem_to_hbm [thread:$0]  %s81, 128, %s83, [#allocation4]
    $region33: #{tpu_custom_call.1} parent=1 // pred_fallthru
      _
    // Predicated region
    $region34: #{tpu_custom_call.1} parent=1 // pred_check
      _
    $region35: #{tpu_custom_call.1} parent=1 // pred_check_branch
      %87 = sbr.rel (0) target = $region37
    $region36: #{tpu_custom_call.1} parent=1 // pred_region
      %89 = dma.done [#allocation4], 128
    $region37: #{tpu_custom_call.1} parent=1 // pred_fallthru
      _
    %90 = vsyncpa [#allocation3], 1
    %91 = vsyncpa [#allocation6], 1
    %92 = vsyncpa [#allocation4], 1

</llo_original>
